<compile_context>
chip_gen: v5e
topology: v5e:2x2
jax: 0.10.0
libtpu: 0.0.40
codegen_flags: <defaults>
</compile_context>

<pallas_src>
import functools

import jax
import jax.numpy as jnp
from jax.experimental import pallas as pl
from jax.experimental.pallas import tpu as pltpu

_NEG_BIG = -1e30          # "minus infinity" that stays finite through exp()
_LANE = 128               # TPU lane width
_MAX_TILE_LANES = 2048    # batch-tile cap (sweep 512/1024/2048/4096); per-tile
                          # VMEM footprint at 2048 lanes is ~1-2 MiB.


def _l0_kernel(tok_ref, len_ref, obs_ref, idx_ref, wme_ref, wp_ref, out_ref,
               *, num_worlds, seq_len):
    """One batch tile.  Layout: lanes = batch, sublanes = worlds / vocab.

    tok_ref (S, TB)        int32  token ids (natural seq[0] layout, seq-major)
    len_ref (1, TB)        int32  utterance lengths
    obs_ref (TB, D)        f32    observation features (native layout)
    idx_ref (1, TB)        int32  queried world index per batch column
    wme_ref (W_pad, V_pad) bf16   folded meaning weights (emb @ Wm).T, zero-padded
    wp_ref  (W_pad, D)     bf16   prior weights Wp.T, zero-padded worlds
    out_ref (1, TB)        f32    log L0 of the indexed world (lane-dense store)
    """
    w_pad, v_pad = wme_ref.shape
    tb = out_ref.shape[1]

    # ---- fused bag-of-token-embeddings encoder ------------------------------
    # C_t[v, b] = #{ s < len[b] : tok[s, b] == v }.  The embedding matmul was
    # folded into wme at init, so the counts are all the encoder has to produce.
    v_col = jax.lax.broadcasted_iota(jnp.int32, (v_pad, 1), 0)      # (V_pad, 1)
    lens = len_ref[...]                                             # (1, TB)
    counts = jnp.zeros((v_pad, tb), jnp.float32)
    for s in range(seq_len):                       # static unroll; S is small
        tok_row = tok_ref[pl.ds(s, 1), :]                           # (1, TB)
        hit = (v_col == tok_row) & (s < lens)                       # (V_pad, TB)
        counts = counts + hit.astype(jnp.float32)

    # ---- MXU: meaning scores + prior logits (bf16 in, f32 accumulate) -------
    scores = jnp.dot(wme_ref[...], counts.astype(jnp.bfloat16),
                     preferred_element_type=jnp.float32)            # (W_pad, TB)
    # "NT" contraction: contract D (last dim of both) -> obs never transposed.
    plogits = jax.lax.dot_general(
        wp_ref[...], obs_ref[...].astype(jnp.bfloat16),
        dimension_numbers=(((1,), (1,)), ((), ())),
        preferred_element_type=jnp.float32)                         # (W_pad, TB)
    # TODO(synk): the two dots could be fused into one block-diag MXU op, but the
    # win is tiny here (launch/DMA bound) and the encoder fold already removed
    # one matmul.

    # log sigmoid, numerically stable: min(x, 0) - log(1 + exp(-|x|)).
    # (log1p would be marginally more accurate for |x| >> 1; difference < 1e-7
    #  at these score magnitudes.)
    log_meaning = jnp.minimum(scores, 0.0) - jnp.log(1.0 + jnp.exp(-jnp.abs(scores)))

    # Joint log-weight; prior softmax denom and L0 normalization cancel, so the
    # unnormalized plogits are used directly.
    lw = log_meaning + plogits                                      # (W_pad, TB)

    # Padded-world mask as a tiny additive (W_pad, 1) column (no full-tile iota).
    w_col = jax.lax.broadcasted_iota(jnp.int32, (w_pad, 1), 0)      # (W_pad, 1)
    wmask = jnp.where(w_col < num_worlds, 0.0, _NEG_BIG)            # (W_pad, 1)
    lw_valid = lw + wmask

    # logsumexp over the world (sublane) axis.
    m = jnp.max(lw_valid, axis=0, keepdims=True)                    # (1, TB)
    lse = m + jnp.log(jnp.sum(jnp.exp(lw_valid - m), axis=0, keepdims=True))

    # One-hot gather of lw[idx[b], b] over sublanes.  Relies on
    # 0 <= idx < num_worlds — the same precondition as torch.gather.
    onehot = w_col == idx_ref[...]                                  # (W_pad, TB)
    sel = jnp.sum(jnp.where(onehot, lw, 0.0), axis=0, keepdims=True)

    out_ref[...] = sel - lse                    # full-width, lane-dense store


def _pick_batch_tiling(batch):
    """Few, wide, balanced lane-dense batch tiles.

    Per-grid-step overhead (~0.35 us) dominates this tiny kernel, so use as few
    tiles as possible (cap _MAX_TILE_LANES lanes each), spread the remainder so
    a batch slightly over the cap does not pad the last tile pathologically, and
    once the batch is large give the "parallel" axis an even number of steps so
    both TensorCores on v7x get work (negligible cost on 1-TC v5e/v6e).
    """
    b_units = pl.cdiv(batch, _LANE)                      # 128-lane groups
    n_tiles = pl.cdiv(b_units, _MAX_TILE_LANES // _LANE)
    if b_units >= 8 and n_tiles % 2 == 1:
        n_tiles += 1
    tile_units = pl.cdiv(b_units, n_tiles)
    block_b = tile_units * _LANE
    return n_tiles, block_b, n_tiles * block_b


def heuristic_l0_pallas(tokens_sb, lengths, obs, world_idx, wme_t, wp_t, *,
                        num_worlds):
    """tokens_sb (S,B) int, lengths (B,) int, obs (B,D) float, world_idx (B,1) int,
    wme_t (W_pad,V_pad) bf16, wp_t (W_pad,D) bf16 -> log L0 (B,) f32."""
    seq_len, batch = tokens_sb.shape
    d = obs.shape[1]
    w_pad, v_pad = wme_t.shape

    n_tiles, block_b, b_pad = _pick_batch_tiling(batch)

    tokens = tokens_sb.astype(jnp.int32)
    len_row = lengths.reshape(1, batch).astype(jnp.int32)
    idx_row = world_idx.reshape(1, batch).astype(jnp.int32)
    obs_f = obs.astype(jnp.float32)
    if b_pad != batch:
        # Only the last tile's remainder is padded; padded columns have length 0
        # and index 0, and their outputs are sliced off below.
        pad = b_pad - batch
        tokens = jnp.pad(tokens, ((0, 0), (0, pad)))
        len_row = jnp.pad(len_row, ((0, 0), (0, pad)))
        idx_row = jnp.pad(idx_row, ((0, 0), (0, pad)))
        obs_f = jnp.pad(obs_f, ((0, pad), (0, 0)))

    out = pl.pallas_call(
        functools.partial(_l0_kernel, num_worlds=num_worlds, seq_len=seq_len),
        out_shape=jax.ShapeDtypeStruct((1, b_pad), jnp.float32),
        grid=(n_tiles,),
        in_specs=[
            pl.BlockSpec((seq_len, block_b), lambda i: (0, i)),   # token ids
            pl.BlockSpec((1, block_b), lambda i: (0, i)),         # lengths
            pl.BlockSpec((block_b, d), lambda i: (i, 0)),         # obs (native layout)
            pl.BlockSpec((1, block_b), lambda i: (0, i)),         # world index
            pl.BlockSpec((w_pad, v_pad), lambda i: (0, 0)),       # folded meaning W (pinned)
            pl.BlockSpec((w_pad, d), lambda i: (0, 0)),           # prior W (pinned)
        ],
        out_specs=pl.BlockSpec((1, block_b), lambda i: (0, i)),
        compiler_params=pltpu.CompilerParams(
            dimension_semantics=("parallel",),   # batch tiles shard across TCs on v7x
            vmem_limit_bytes=32 * 1024 * 1024,   # v5e's default scoped VMEM is 16 MiB
        ),
    )(tokens, len_row, obs_f, idx_row, wme_t, wp_t)
    return out[0, :batch]


def _pad2d(x, rows, cols):
    r, c = x.shape
    return jnp.pad(x, ((0, rows - r), (0, cols - c)))


class HeuristicL0:
    """Mirrors HeuristicL0.forward: (seq, input, heuristic_state, context).

    world_prior_fn / meaning_fn / RSA.make are injected callables in the original
    module; here they are deterministic synthetic stand-ins:
      meaning_fn     = sigmoid( bag_of_embeddings(tokens) @ Wm )
      world_prior_fn = softmax( obs @ Wp )
    """

    def __init__(self, emb_table, wm, wp):
        vocab, hidden = emb_table.shape
        num_worlds = wm.shape[1]
        d = wp.shape[0]
        assert wm.shape[0] == hidden and wp.shape[1] == num_worlds
        self._num_worlds = num_worlds
        w_pad = max(16, pl.cdiv(num_worlds, 16) * 16)   # bf16 sublane tile = 16
        v_pad = max(16, pl.cdiv(vocab, 16) * 16)
        # Fold the embedding matmul into the meaning head once at init:
        #   U @ Wm = (C @ E) @ Wm = C @ (E @ Wm)    (C = token-count matrix)
        wme = emb_table.astype(jnp.float32) @ wm.astype(jnp.float32)       # (V, W)
        self._wme_t = _pad2d(wme.T, w_pad, v_pad).astype(jnp.bfloat16)     # (W_pad, V_pad)
        self._wp_t = _pad2d(wp.astype(jnp.float32).T, w_pad, d).astype(jnp.bfloat16)

    def forward(self, seq, input, heuristic_state, context=None):
        tokens_sb, lengths = seq        # seq[0]: (S, B) token ids, seq[1]: (B,)
        obs, world_idx = context        # context[0]: (B, D), context[1]: (B, 1)
        # The kernel consumes seq[0] in its native (S, B) layout; the original
        # module's transpose(0, 1) is only a layout change for its meaning_fn.
        log_p = heuristic_l0_pallas(
            tokens_sb, lengths, obs, world_idx, self._wme_t, self._wp_t,
            num_worlds=self._num_worlds)
        # torch.log(torch.gather(L_0.p(), 1, context[1]).squeeze()) -> (B,)
        return log_p, heuristic_state


def _reference_log_l0(tokens_sb, lengths, obs, world_idx, emb_table, wm, wp):
    """Pure-JAX f32 reference: gather of the normalized L0 distribution."""
    tokens_bs = tokens_sb.T                                          # (B, S)
    e = emb_table[tokens_bs]                                         # (B, S, H)
    s = tokens_bs.shape[1]
    mask = (jnp.arange(s)[None, :] < lengths[:, None]).astype(e.dtype)
    u = jnp.sum(e * mask[..., None], axis=1)                         # (B, H)
    meaning = jax.nn.sigmoid(u @ wm)
    prior = jax.nn.softmax(obs @ wp, axis=-1)
    l0 = meaning * prior
    l0 = l0 / jnp.sum(l0, axis=-1, keepdims=True)
    return jnp.log(jnp.take_along_axis(l0, world_idx, axis=1))[:, 0]


def _make_inputs(key, batch, seq_len, vocab, d, num_worlds):
    k_tok, k_len, k_obs, k_idx = jax.random.split(key, 4)
    tokens_sb = jax.random.randint(k_tok, (seq_len, batch), 0, vocab)
    lengths = jax.random.randint(k_len, (batch,), 1, seq_len + 1)
    obs = jax.random.normal(k_obs, (batch, d), dtype=jnp.float32)
    world_idx = jax.random.randint(k_idx, (batch, 1), 0, num_worlds)
    return tokens_sb, lengths, obs, world_idx


if __name__ == "__main__":
    S, V, H, D, W = 8, 32, 32, 32, 16

    key = jax.random.PRNGKey(0)
    k_emb, k_wm, k_wp, k_in0, k_in1 = jax.random.split(key, 5)

    emb_table = jax.random.normal(k_emb, (V, H), dtype=jnp.float32) * 0.1
    wm = jax.random.normal(k_wm, (H, W), dtype=jnp.float32) * 0.1
    wp = jax.random.normal(k_wp, (D, W), dtype=jnp.float32) * 0.1

    model = HeuristicL0(emb_table, wm, wp)

    # Small primary case + a multi-tile / padded-tail case (grid of 2 on the
    # batch axis, exercising the balanced-tile and v7x-split path).
    for batch, k_in in ((8, k_in0), (2176, k_in1)):
        tokens_sb, lengths, obs, world_idx = _make_inputs(k_in, batch, S, V, D, W)
        heuristic_state = jnp.zeros((batch, 4), dtype=jnp.float32)  # passed through

        log_p, state_out = model.forward(
            (tokens_sb, lengths), None, heuristic_state, context=(obs, world_idx))
        jax.block_until_ready(log_p)
        jax.block_until_ready(state_out)

        ref = _reference_log_l0(tokens_sb, lengths, obs, world_idx, emb_table, wm, wp)
        assert log_p.shape == (batch,)
        assert state_out is heuristic_state
        # (A strict `log_p < 0` check is not guaranteed under bf16 MXU rounding
        #  when one world dominates, so only compare against the f32 reference.)
        assert bool(jnp.allclose(log_p, ref, atol=2e-2, rtol=2e-2)), (
            float(jnp.max(jnp.abs(log_p - ref))))

    print("KERNEL_OK")
</pallas_src>

<mosaic_0001>
module attributes {stable_mosaic.version = 11 : i64} {
  func.func @_l0_kernel(%arg0: i32, %arg1: memref<8x128xi32, #tpu.memory_space<vmem>>, %arg2: memref<1x128xi32, #tpu.memory_space<vmem>>, %arg3: memref<128x32xf32, #tpu.memory_space<vmem>>, %arg4: memref<1x128xi32, #tpu.memory_space<vmem>>, %arg5: memref<16x32xbf16, #tpu.memory_space<vmem>>, %arg6: memref<16x32xbf16, #tpu.memory_space<vmem>>, %arg7: memref<1x128xf32, #tpu.memory_space<vmem>>) attributes {dimension_semantics = [#tpu.dimension_semantics<parallel>], iteration_bounds = array<i64: 1>, scalar_prefetch = 0 : i64, scratch_operands = 0 : i64, tpu.core_type = #tpu.core_type<tc>, window_params = [{transform_indices = @transform_0, window_bounds = array<i64: 8, 128>}, {transform_indices = @transform_1, window_bounds = array<i64: 1, 128>}, {transform_indices = @transform_2, window_bounds = array<i64: 128, 32>}, {transform_indices = @transform_3, window_bounds = array<i64: 1, 128>}, {pipeline_mode = #tpu.pipeline_mode<synchronous>, transform_indices = @transform_4, window_bounds = array<i64: 16, 32>}, {pipeline_mode = #tpu.pipeline_mode<synchronous>, transform_indices = @transform_5, window_bounds = array<i64: 16, 32>}, {transform_indices = @transform_6, window_bounds = array<i64: 1, 128>}]} {
    %0 = tpu.iota {dimensions = array<i32: 0>} : vector<32x1xi32>
    %c0 = arith.constant 0 : index
    %c0_0 = arith.constant 0 : index
    %1 = vector.load %arg2[%c0, %c0_0] : memref<1x128xi32, #tpu.memory_space<vmem>>, vector<1x128xi32>
    %cst = arith.constant 0.000000e+00 : f32
    %2 = vector.broadcast %cst : f32 to vector<32x128xf32>
    %c0_1 = arith.constant 0 : index
    %c0_2 = arith.constant 0 : index
    %3 = vector.load %arg1[%c0_1, %c0_2] : memref<8x128xi32, #tpu.memory_space<vmem>>, vector<1x128xi32>
    %4 = vector.broadcast %0 : vector<32x1xi32> to vector<32x128xi32>
    %5 = vector.broadcast %3 : vector<1x128xi32> to vector<32x128xi32>
    %6 = arith.cmpi eq, %4, %5 : vector<32x128xi32>
    %c0_i32 = arith.constant 0 : i32
    %7 = vector.broadcast %c0_i32 : i32 to vector<1x128xi32>
    %8 = arith.cmpi sgt, %1, %7 : vector<1x128xi32>
    %9 = vector.broadcast %8 : vector<1x128xi1> to vector<32x128xi1>
    %10 = arith.andi %6, %9 : vector<32x128xi1>
    %11 = arith.extui %10 : vector<32x128xi1> to vector<32x128xi32>
    %12 = arith.sitofp %11 : vector<32x128xi32> to vector<32x128xf32>
    %13 = arith.addf %2, %12 : vector<32x128xf32>
    %c1 = arith.constant 1 : index
    %c0_3 = arith.constant 0 : index
    %14 = vector.load %arg1[%c1, %c0_3] : memref<8x128xi32, #tpu.memory_space<vmem>>, vector<1x128xi32>
    %15 = vector.broadcast %0 : vector<32x1xi32> to vector<32x128xi32>
    %16 = vector.broadcast %14 : vector<1x128xi32> to vector<32x128xi32>
    %17 = arith.cmpi eq, %15, %16 : vector<32x128xi32>
    %c1_i32 = arith.constant 1 : i32
    %18 = vector.broadcast %c1_i32 : i32 to vector<1x128xi32>
    %19 = arith.cmpi sgt, %1, %18 : vector<1x128xi32>
    %20 = vector.broadcast %19 : vector<1x128xi1> to vector<32x128xi1>
    %21 = arith.andi %17, %20 : vector<32x128xi1>
    %22 = arith.extui %21 : vector<32x128xi1> to vector<32x128xi32>
    %23 = arith.sitofp %22 : vector<32x128xi32> to vector<32x128xf32>
    %24 = arith.addf %13, %23 : vector<32x128xf32>
    %c2 = arith.constant 2 : index
    %c0_4 = arith.constant 0 : index
    %25 = vector.load %arg1[%c2, %c0_4] : memref<8x128xi32, #tpu.memory_space<vmem>>, vector<1x128xi32>
    %26 = vector.broadcast %0 : vector<32x1xi32> to vector<32x128xi32>
    %27 = vector.broadcast %25 : vector<1x128xi32> to vector<32x128xi32>
    %28 = arith.cmpi eq, %26, %27 : vector<32x128xi32>
    %c2_i32 = arith.constant 2 : i32
    %29 = vector.broadcast %c2_i32 : i32 to vector<1x128xi32>
    %30 = arith.cmpi sgt, %1, %29 : vector<1x128xi32>
    %31 = vector.broadcast %30 : vector<1x128xi1> to vector<32x128xi1>
    %32 = arith.andi %28, %31 : vector<32x128xi1>
    %33 = arith.extui %32 : vector<32x128xi1> to vector<32x128xi32>
    %34 = arith.sitofp %33 : vector<32x128xi32> to vector<32x128xf32>
    %35 = arith.addf %24, %34 : vector<32x128xf32>
    %c3 = arith.constant 3 : index
    %c0_5 = arith.constant 0 : index
    %36 = vector.load %arg1[%c3, %c0_5] : memref<8x128xi32, #tpu.memory_space<vmem>>, vector<1x128xi32>
    %37 = vector.broadcast %0 : vector<32x1xi32> to vector<32x128xi32>
    %38 = vector.broadcast %36 : vector<1x128xi32> to vector<32x128xi32>
    %39 = arith.cmpi eq, %37, %38 : vector<32x128xi32>
    %c3_i32 = arith.constant 3 : i32
    %40 = vector.broadcast %c3_i32 : i32 to vector<1x128xi32>
    %41 = arith.cmpi sgt, %1, %40 : vector<1x128xi32>
    %42 = vector.broadcast %41 : vector<1x128xi1> to vector<32x128xi1>
    %43 = arith.andi %39, %42 : vector<32x128xi1>
    %44 = arith.extui %43 : vector<32x128xi1> to vector<32x128xi32>
    %45 = arith.sitofp %44 : vector<32x128xi32> to vector<32x128xf32>
    %46 = arith.addf %35, %45 : vector<32x128xf32>
    %c4 = arith.constant 4 : index
    %c0_6 = arith.constant 0 : index
    %47 = vector.load %arg1[%c4, %c0_6] : memref<8x128xi32, #tpu.memory_space<vmem>>, vector<1x128xi32>
    %48 = vector.broadcast %0 : vector<32x1xi32> to vector<32x128xi32>
    %49 = vector.broadcast %47 : vector<1x128xi32> to vector<32x128xi32>
    %50 = arith.cmpi eq, %48, %49 : vector<32x128xi32>
    %c4_i32 = arith.constant 4 : i32
    %51 = vector.broadcast %c4_i32 : i32 to vector<1x128xi32>
    %52 = arith.cmpi sgt, %1, %51 : vector<1x128xi32>
    %53 = vector.broadcast %52 : vector<1x128xi1> to vector<32x128xi1>
    %54 = arith.andi %50, %53 : vector<32x128xi1>
    %55 = arith.extui %54 : vector<32x128xi1> to vector<32x128xi32>
    %56 = arith.sitofp %55 : vector<32x128xi32> to vector<32x128xf32>
    %57 = arith.addf %46, %56 : vector<32x128xf32>
    %c5 = arith.constant 5 : index
    %c0_7 = arith.constant 0 : index
    %58 = vector.load %arg1[%c5, %c0_7] : memref<8x128xi32, #tpu.memory_space<vmem>>, vector<1x128xi32>
    %59 = vector.broadcast %0 : vector<32x1xi32> to vector<32x128xi32>
    %60 = vector.broadcast %58 : vector<1x128xi32> to vector<32x128xi32>
    %61 = arith.cmpi eq, %59, %60 : vector<32x128xi32>
    %c5_i32 = arith.constant 5 : i32
    %62 = vector.broadcast %c5_i32 : i32 to vector<1x128xi32>
    %63 = arith.cmpi sgt, %1, %62 : vector<1x128xi32>
    %64 = vector.broadcast %63 : vector<1x128xi1> to vector<32x128xi1>
    %65 = arith.andi %61, %64 : vector<32x128xi1>
    %66 = arith.extui %65 : vector<32x128xi1> to vector<32x128xi32>
    %67 = arith.sitofp %66 : vector<32x128xi32> to vector<32x128xf32>
    %68 = arith.addf %57, %67 : vector<32x128xf32>
    %c6 = arith.constant 6 : index
    %c0_8 = arith.constant 0 : index
    %69 = vector.load %arg1[%c6, %c0_8] : memref<8x128xi32, #tpu.memory_space<vmem>>, vector<1x128xi32>
    %70 = vector.broadcast %0 : vector<32x1xi32> to vector<32x128xi32>
    %71 = vector.broadcast %69 : vector<1x128xi32> to vector<32x128xi32>
    %72 = arith.cmpi eq, %70, %71 : vector<32x128xi32>
    %c6_i32 = arith.constant 6 : i32
    %73 = vector.broadcast %c6_i32 : i32 to vector<1x128xi32>
    %74 = arith.cmpi sgt, %1, %73 : vector<1x128xi32>
    %75 = vector.broadcast %74 : vector<1x128xi1> to vector<32x128xi1>
    %76 = arith.andi %72, %75 : vector<32x128xi1>
    %77 = arith.extui %76 : vector<32x128xi1> to vector<32x128xi32>
    %78 = arith.sitofp %77 : vector<32x128xi32> to vector<32x128xf32>
    %79 = arith.addf %68, %78 : vector<32x128xf32>
    %c7 = arith.constant 7 : index
    %c0_9 = arith.constant 0 : index
    %80 = vector.load %arg1[%c7, %c0_9] : memref<8x128xi32, #tpu.memory_space<vmem>>, vector<1x128xi32>
    %81 = vector.broadcast %0 : vector<32x1xi32> to vector<32x128xi32>
    %82 = vector.broadcast %80 : vector<1x128xi32> to vector<32x128xi32>
    %83 = arith.cmpi eq, %81, %82 : vector<32x128xi32>
    %c7_i32 = arith.constant 7 : i32
    %84 = vector.broadcast %c7_i32 : i32 to vector<1x128xi32>
    %85 = arith.cmpi sgt, %1, %84 : vector<1x128xi32>
    %86 = vector.broadcast %85 : vector<1x128xi1> to vector<32x128xi1>
    %87 = arith.andi %83, %86 : vector<32x128xi1>
    %88 = arith.extui %87 : vector<32x128xi1> to vector<32x128xi32>
    %89 = arith.sitofp %88 : vector<32x128xi32> to vector<32x128xf32>
    %90 = arith.addf %79, %89 : vector<32x128xf32>
    %c0_10 = arith.constant 0 : index
    %c0_11 = arith.constant 0 : index
    %91 = vector.load %arg5[%c0_10, %c0_11] : memref<16x32xbf16, #tpu.memory_space<vmem>>, vector<16x32xbf16>
    %92 = arith.truncf %90 : vector<32x128xf32> to vector<32x128xbf16>
    %cst_12 = arith.constant dense<0.000000e+00> : vector<16x128xf32>
    %93 = tpu.matmul %91, %92, %cst_12 {dimension_numbers = #tpu.dot_dimension_numbers<[1], [0], [0], [1], [0, 0, 1, 1], [], []>} : vector<16x32xbf16>, vector<32x128xbf16>, vector<16x128xf32> -> vector<16x128xf32>
    %c0_13 = arith.constant 0 : index
    %c0_14 = arith.constant 0 : index
    %94 = vector.load %arg6[%c0_13, %c0_14] : memref<16x32xbf16, #tpu.memory_space<vmem>>, vector<16x32xbf16>
    %c0_15 = arith.constant 0 : index
    %c0_16 = arith.constant 0 : index
    %95 = vector.load %arg3[%c0_15, %c0_16] : memref<128x32xf32, #tpu.memory_space<vmem>>, vector<128x32xf32>
    %96 = arith.truncf %95 : vector<128x32xf32> to vector<128x32xbf16>
    %cst_17 = arith.constant dense<0.000000e+00> : vector<16x128xf32>
    %97 = tpu.matmul %94, %96, %cst_17 {dimension_numbers = #tpu.dot_dimension_numbers<[1], [1], [0], [0], [0, 0, 1, 0], [], []>} : vector<16x32xbf16>, vector<128x32xbf16>, vector<16x128xf32> -> vector<16x128xf32>
    %cst_18 = arith.constant 0.000000e+00 : f32
    %98 = vector.broadcast %cst_18 : f32 to vector<16x128xf32>
    %99 = arith.minimumf %93, %98 : vector<16x128xf32>
    %100 = math.absf %93 : vector<16x128xf32>
    %cst_19 = arith.constant 0.000000e+00 : f32
    %101 = vector.broadcast %cst_19 : f32 to vector<16x128xf32>
    %102 = arith.subf %101, %100 : vector<16x128xf32>
    %103 = math.exp %102 : vector<16x128xf32>
    %cst_20 = arith.constant 1.000000e+00 : f32
    %104 = vector.broadcast %cst_20 : f32 to vector<16x128xf32>
    %105 = arith.addf %104, %103 : vector<16x128xf32>
    %106 = math.log %105 : vector<16x128xf32>
    %107 = arith.subf %99, %106 : vector<16x128xf32>
    %108 = arith.addf %107, %97 : vector<16x128xf32>
    %109 = tpu.iota {dimensions = array<i32: 0>} : vector<16x1xi32>
    %c16_i32 = arith.constant 16 : i32
    %110 = vector.broadcast %c16_i32 : i32 to vector<16x1xi32>
    %111 = arith.cmpi slt, %109, %110 : vector<16x1xi32>
    %cst_21 = arith.constant 0.000000e+00 : f32
    %cst_22 = arith.constant -1.000000e+30 : f32
    %112 = vector.broadcast %cst_21 : f32 to vector<16x1xf32>
    %113 = vector.broadcast %cst_22 : f32 to vector<16x1xf32>
    %114 = arith.select %111, %112, %113 : vector<16x1xi1>, vector<16x1xf32>
    %115 = vector.broadcast %114 : vector<16x1xf32> to vector<16x128xf32>
    %116 = arith.addf %108, %115 : vector<16x128xf32>
    %cst_23 = arith.constant dense<0xFF800000> : vector<128xf32>
    %117 = vector.multi_reduction <maximumf>, %116, %cst_23 [0] : vector<16x128xf32> to vector<128xf32>
    %118 = vector.shape_cast %117 : vector<128xf32> to vector<1x128xf32>
    %119 = vector.broadcast %118 : vector<1x128xf32> to vector<16x128xf32>
    %120 = arith.subf %116, %119 : vector<16x128xf32>
    %121 = math.exp %120 : vector<16x128xf32>
    %cst_24 = arith.constant dense<0.000000e+00> : vector<128xf32>
    %122 = vector.multi_reduction <add>, %121, %cst_24 [0] : vector<16x128xf32> to vector<128xf32>
    %123 = vector.shape_cast %122 : vector<128xf32> to vector<1x128xf32>
    %124 = math.log %123 : vector<1x128xf32>
    %125 = arith.addf %118, %124 : vector<1x128xf32>
    %c0_25 = arith.constant 0 : index
    %c0_26 = arith.constant 0 : index
    %126 = vector.load %arg4[%c0_25, %c0_26] : memref<1x128xi32, #tpu.memory_space<vmem>>, vector<1x128xi32>
    %127 = vector.broadcast %109 : vector<16x1xi32> to vector<16x128xi32>
    %128 = vector.broadcast %126 : vector<1x128xi32> to vector<16x128xi32>
    %129 = arith.cmpi eq, %127, %128 : vector<16x128xi32>
    %cst_27 = arith.constant 0.000000e+00 : f32
    %130 = vector.broadcast %cst_27 : f32 to vector<16x128xf32>
    %131 = arith.select %129, %108, %130 : vector<16x128xi1>, vector<16x128xf32>
    %cst_28 = arith.constant dense<0.000000e+00> : vector<128xf32>
    %132 = vector.multi_reduction <add>, %131, %cst_28 [0] : vector<16x128xf32> to vector<128xf32>
    %133 = vector.shape_cast %132 : vector<128xf32> to vector<1x128xf32>
    %134 = arith.subf %133, %125 : vector<1x128xf32>
    %c0_29 = arith.constant 0 : index
    %c0_30 = arith.constant 0 : index
    %135 = vector.load %arg7[%c0_29, %c0_30] : memref<1x128xf32, #tpu.memory_space<vmem>>, vector<1x128xf32>
    tpu.vector_store %arg7[%c0_29, %c0_30], %134 {strides = array<i32>} : memref<1x128xf32, #tpu.memory_space<vmem>>, vector<1x128xf32>,
    return
  }
  func.func @transform_0(%arg0: i32) -> (i32, i32) {
    %c0_i32 = arith.constant 0 : i32
    %c0_i32_0 = arith.constant 0 : i32
    return %c0_i32, %arg0 : i32, i32
  }
  func.func @transform_1(%arg0: i32) -> (i32, i32) {
    %c0_i32 = arith.constant 0 : i32
    %c0_i32_0 = arith.constant 0 : i32
    return %c0_i32, %arg0 : i32, i32
  }
  func.func @transform_2(%arg0: i32) -> (i32, i32) {
    %c0_i32 = arith.constant 0 : i32
    %c0_i32_0 = arith.constant 0 : i32
    return %arg0, %c0_i32 : i32, i32
  }
  func.func @transform_3(%arg0: i32) -> (i32, i32) {
    %c0_i32 = arith.constant 0 : i32
    %c0_i32_0 = arith.constant 0 : i32
    return %c0_i32, %arg0 : i32, i32
  }
  func.func @transform_4(%arg0: i32) -> (i32, i32) {
    %c0_i32 = arith.constant 0 : i32
    %c0_i32_0 = arith.constant 0 : i32
    %c0_i32_1 = arith.constant 0 : i32
    return %c0_i32, %c0_i32_0 : i32, i32
  }
  func.func @transform_5(%arg0: i32) -> (i32, i32) {
    %c0_i32 = arith.constant 0 : i32
    %c0_i32_0 = arith.constant 0 : i32
    %c0_i32_1 = arith.constant 0 : i32
    return %c0_i32, %c0_i32_0 : i32, i32
  }
  func.func @transform_6(%arg0: i32) -> (i32, i32) {
    %c0_i32 = arith.constant 0 : i32
    %c0_i32_0 = arith.constant 0 : i32
    return %c0_i32, %arg0 : i32, i32
  }
}

</mosaic_0001>

<llo_original>
// kernel: tpu_custom_call.1
$region0: #{tpu_custom_call.1}
  #allocation0 [shape = 'u32[]', space=smem, size = 0x4, offset = 0x4, fixed_abs, tag = 'smem constant byte address 0x4 - core index']
  #allocation1 [shape = 'u32[72,128]{1,0:T(1,128)}', space=vmem, size = 0x9000, scoped, tag = 'internal scratch']
  %s0 = inlined_call_operand.vmem [shape: s32[8,128], index: 0, kind: input, shape index: {}]
  %s1 = inlined_call_operand.vmem [shape: s32[1,128], index: 1, kind: input, shape index: {}]
  %s2 = inlined_call_operand.vmem [shape: f32[128,32], index: 2, kind: input, shape index: {}]
  %s3 = inlined_call_operand.vmem [shape: s32[1,128], index: 3, kind: input, shape index: {}]
  %s4 = inlined_call_operand.vmem [shape: bf16[16,32], index: 4, kind: input, shape index: {}]
  %s5 = inlined_call_operand.vmem [shape: bf16[16,32], index: 5, kind: input, shape index: {}]
  %s6 = inlined_call_operand.hbm [shape: f32[1,128], index: 6, kind: output, shape index: {}]
  %s7 = sld [smem:[#allocation0]]
  $region34: #{tpu_custom_call.1} parent=0
    _
  %s9 = ssub.s32 1, %s7
  %s10 = scalar_select 0, %s9, %s7
  $region1: #{tpu_custom_call.1} parent=0
    #allocation2 [shape = 'u8[512]{0}', space=vmem, size = 0x400, scoped, tag = 'output window, operand 0, single buffered']
    #allocation3 [shape = 's32[1]{0}', space=sflag, size = 0x4, scoped, tag = 'scoped memory for tpu_custom_call.1']
    %11 = vsyncpa [#allocation3], 0
    // Predicated region
    $region2: #{tpu_custom_call.1} parent=1 // pred_check
      _
    $region3: #{tpu_custom_call.1} parent=1 // pred_check_branch
      %13 = sbr.rel (0) target = $region5
    $region4: #{tpu_custom_call.1} parent=1 // pred_region
      _
    $region5: #{tpu_custom_call.1} parent=1 // pred_fallthru
      _
    // Predicated region
    $region6: #{tpu_custom_call.1} parent=1 // pred_check
      _
    $region7: #{tpu_custom_call.1} parent=1 // pred_check_branch
      %15 = sbr.rel (0) target = $region9
    $region8: #{tpu_custom_call.1} parent=1 // pred_region
      _
    $region9: #{tpu_custom_call.1} parent=1 // pred_fallthru
      _
    // Predicated region
    $region10: #{tpu_custom_call.1} parent=1 // pred_check
      _
    $region11: #{tpu_custom_call.1} parent=1 // pred_check_branch
      %17 = sbr.rel (0) target = $region13
    $region12: #{tpu_custom_call.1} parent=1 // pred_region
      _
    $region13: #{tpu_custom_call.1} parent=1 // pred_fallthru
      _
    // Predicated region
    $region14: #{tpu_custom_call.1} parent=1 // pred_check
      _
    $region15: #{tpu_custom_call.1} parent=1 // pred_check_branch
      %19 = sbr.rel (0) target = $region17
    $region16: #{tpu_custom_call.1} parent=1 // pred_region
      _
    $region17: #{tpu_custom_call.1} parent=1 // pred_fallthru
      _
    // Predicated region
    $region18: #{tpu_custom_call.1} parent=1 // pred_check
      _
    $region19: #{tpu_custom_call.1} parent=1 // pred_check_branch
      %21 = sbr.rel (0) target = $region21
    $region20: #{tpu_custom_call.1} parent=1 // pred_region
      _
    $region21: #{tpu_custom_call.1} parent=1 // pred_fallthru
      _
    // Predicated region
    $region22: #{tpu_custom_call.1} parent=1 // pred_check
      _
    $region23: #{tpu_custom_call.1} parent=1 // pred_check_branch
      %23 = sbr.rel (0) target = $region25
    $region24: #{tpu_custom_call.1} parent=1 // pred_region
      _
    $region25: #{tpu_custom_call.1} parent=1 // pred_fallthru
      _
    %v25 = vlaneseq
    %v26 = vshrl.u32 %v25, 7
    %v27 = vadd.s32 %v26, 8
    %v28 = vadd.s32 %v26, 16
    %v29 = vadd.s32 %v26, 24
    %v30 = vld [vmem:[%s1] sm:$0x1]
    %v31 = vld [vmem:[%s0] sm:$0x1]
    %v32 = vperm.slane %v31, 0
    %vm33 = vcmp.eq.s32.totalorder %v26, %v32
    %vm34 = vcmp.eq.s32.totalorder %v27, %v32
    %vm35 = vcmp.eq.s32.totalorder %v28, %v32
    %vm36 = vcmp.eq.s32.totalorder %v29, %v32
    %vm37 = vcmp.gt.s32.totalorder %v30, 0
    %v38 = vsel %vm37, 1, 0
    %v39 = vperm.slane %v38, 0
    %vm40 = vcmp.eq.s32.totalorder %v39, 1
    %vm41 = vmand %vm33, %vm40
    %vm42 = vmand %vm34, %vm40
    %vm43 = vmand %vm35, %vm40
    %vm44 = vmand %vm36, %vm40
    %v45 = vsel %vm41, 1, 0
    %v46 = vsel %vm42, 1, 0
    %v47 = vsel %vm43, 1, 0
    %v48 = vsel %vm44, 1, 0
    %v49 = vcvt.s32.f32 %v45
    %v50 = vcvt.s32.f32 %v46
    %v51 = vcvt.s32.f32 %v47
    %v52 = vcvt.s32.f32 %v48
    %v53 = vadd.f32 %v49, 0.0
    %v54 = vadd.f32 %v50, 0.0
    %v55 = vadd.f32 %v51, 0.0
    %v56 = vadd.f32 %v52, 0.0
    %v57 = vld [vmem:[%s0 + $0x1] sm:$0x1]
    %v58 = vperm.slane %v57, 0
    %vm59 = vcmp.eq.s32.totalorder %v26, %v58
    %vm60 = vcmp.eq.s32.totalorder %v27, %v58
    %vm61 = vcmp.eq.s32.totalorder %v28, %v58
    %vm62 = vcmp.eq.s32.totalorder %v29, %v58
    %vm63 = vcmp.gt.s32.totalorder %v30, 1
    %v64 = vsel %vm63, 1, 0
    %v65 = vperm.slane %v64, 0
    %vm66 = vcmp.eq.s32.totalorder %v65, 1
    %vm67 = vmand %vm59, %vm66
    %vm68 = vmand %vm60, %vm66
    %vm69 = vmand %vm61, %vm66
    %vm70 = vmand %vm62, %vm66
    %v71 = vsel %vm67, 1, 0
    %v72 = vsel %vm68, 1, 0
    %v73 = vsel %vm69, 1, 0
    %v74 = vsel %vm70, 1, 0
    %v75 = vcvt.s32.f32 %v71
    %v76 = vcvt.s32.f32 %v72
    %v77 = vcvt.s32.f32 %v73
    %v78 = vcvt.s32.f32 %v74
    %v79 = vadd.f32 %v53, %v75
    %v80 = vadd.f32 %v54, %v76
    %v81 = vadd.f32 %v55, %v77
    %v82 = vadd.f32 %v56, %v78
    %v83 = vld [vmem:[%s0 + $0x2] sm:$0x1]
    %v84 = vperm.slane %v83, 0
    %vm85 = vcmp.eq.s32.totalorder %v26, %v84
    %vm86 = vcmp.eq.s32.totalorder %v27, %v84
    %vm87 = vcmp.eq.s32.totalorder %v28, %v84
    %vm88 = vcmp.eq.s32.totalorder %v29, %v84
    %vm89 = vcmp.gt.s32.totalorder %v30, 2
    %v90 = vsel %vm89, 1, 0
    %v91 = vperm.slane %v90, 0
    %vm92 = vcmp.eq.s32.totalorder %v91, 1
    %vm93 = vmand %vm85, %vm92
    %vm94 = vmand %vm86, %vm92
    %vm95 = vmand %vm87, %vm92
    %vm96 = vmand %vm88, %vm92
    %v97 = vsel %vm93, 1, 0
    %v98 = vsel %vm94, 1, 0
    %v99 = vsel %vm95, 1, 0
    %v100 = vsel %vm96, 1, 0
    %v101 = vcvt.s32.f32 %v97
    %v102 = vcvt.s32.f32 %v98
    %v103 = vcvt.s32.f32 %v99
    %v104 = vcvt.s32.f32 %v100
    %v105 = vadd.f32 %v79, %v101
    %v106 = vadd.f32 %v80, %v102
    %v107 = vadd.f32 %v81, %v103
    %v108 = vadd.f32 %v82, %v104
    %v109 = vld [vmem:[%s0 + $0x3] sm:$0x1]
    %v110 = vperm.slane %v109, 0
    %vm111 = vcmp.eq.s32.totalorder %v26, %v110
    %vm112 = vcmp.eq.s32.totalorder %v27, %v110
    %vm113 = vcmp.eq.s32.totalorder %v28, %v110
    %vm114 = vcmp.eq.s32.totalorder %v29, %v110
    %vm115 = vcmp.gt.s32.totalorder %v30, 3
    %v116 = vsel %vm115, 1, 0
    %v117 = vperm.slane %v116, 0
    %vm118 = vcmp.eq.s32.totalorder %v117, 1
    %vm119 = vmand %vm111, %vm118
    %vm120 = vmand %vm112, %vm118
    %vm121 = vmand %vm113, %vm118
    %vm122 = vmand %vm114, %vm118
    %v123 = vsel %vm119, 1, 0
    %v124 = vsel %vm120, 1, 0
    %v125 = vsel %vm121, 1, 0
    %v126 = vsel %vm122, 1, 0
    %v127 = vcvt.s32.f32 %v123
    %v128 = vcvt.s32.f32 %v124
    %v129 = vcvt.s32.f32 %v125
    %v130 = vcvt.s32.f32 %v126
    %v131 = vadd.f32 %v105, %v127
    %v132 = vadd.f32 %v106, %v128
    %v133 = vadd.f32 %v107, %v129
    %v134 = vadd.f32 %v108, %v130
    %v135 = vld [vmem:[%s0 + $0x4] sm:$0x1]
    %v136 = vperm.slane %v135, 0
    %vm137 = vcmp.eq.s32.totalorder %v26, %v136
    %vm138 = vcmp.eq.s32.totalorder %v27, %v136
    %vm139 = vcmp.eq.s32.totalorder %v28, %v136
    %vm140 = vcmp.eq.s32.totalorder %v29, %v136
    %vm141 = vcmp.gt.s32.totalorder %v30, 4
    %v142 = vsel %vm141, 1, 0
    %v143 = vperm.slane %v142, 0
    %vm144 = vcmp.eq.s32.totalorder %v143, 1
    %vm145 = vmand %vm137, %vm144
    %vm146 = vmand %vm138, %vm144
    %vm147 = vmand %vm139, %vm144
    %vm148 = vmand %vm140, %vm144
    %v149 = vsel %vm145, 1, 0
    %v150 = vsel %vm146, 1, 0
    %v151 = vsel %vm147, 1, 0
    %v152 = vsel %vm148, 1, 0
    %v153 = vcvt.s32.f32 %v149
    %v154 = vcvt.s32.f32 %v150
    %v155 = vcvt.s32.f32 %v151
    %v156 = vcvt.s32.f32 %v152
    %v157 = vadd.f32 %v131, %v153
    %v158 = vadd.f32 %v132, %v154
    %v159 = vadd.f32 %v133, %v155
    %v160 = vadd.f32 %v134, %v156
    %v161 = vld [vmem:[%s0 + $0x5] sm:$0x1]
    %v162 = vperm.slane %v161, 0
    %vm163 = vcmp.eq.s32.totalorder %v26, %v162
    %vm164 = vcmp.eq.s32.totalorder %v27, %v162
    %vm165 = vcmp.eq.s32.totalorder %v28, %v162
    %vm166 = vcmp.eq.s32.totalorder %v29, %v162
    %vm167 = vcmp.gt.s32.totalorder %v30, 5
    %v168 = vsel %vm167, 1, 0
    %v169 = vperm.slane %v168, 0
    %vm170 = vcmp.eq.s32.totalorder %v169, 1
    %vm171 = vmand %vm163, %vm170
    %vm172 = vmand %vm164, %vm170
    %vm173 = vmand %vm165, %vm170
    %vm174 = vmand %vm166, %vm170
    %v175 = vsel %vm171, 1, 0
    %v176 = vsel %vm172, 1, 0
    %v177 = vsel %vm173, 1, 0
    %v178 = vsel %vm174, 1, 0
    %v179 = vcvt.s32.f32 %v175
    %v180 = vcvt.s32.f32 %v176
    %v181 = vcvt.s32.f32 %v177
    %v182 = vcvt.s32.f32 %v178
    %v183 = vadd.f32 %v157, %v179
    %v184 = vadd.f32 %v158, %v180
    %v185 = vadd.f32 %v159, %v181
    %v186 = vadd.f32 %v160, %v182
    %v187 = vld [vmem:[%s0 + $0x6] sm:$0x1]
    %v188 = vperm.slane %v187, 0
    %vm189 = vcmp.eq.s32.totalorder %v26, %v188
    %vm190 = vcmp.eq.s32.totalorder %v27, %v188
    %vm191 = vcmp.eq.s32.totalorder %v28, %v188
    %vm192 = vcmp.eq.s32.totalorder %v29, %v188
    %vm193 = vcmp.gt.s32.totalorder %v30, 6
    %v194 = vsel %vm193, 1, 0
    %v195 = vperm.slane %v194, 0
    %vm196 = vcmp.eq.s32.totalorder %v195, 1
    %vm197 = vmand %vm189, %vm196
    %vm198 = vmand %vm190, %vm196
    %vm199 = vmand %vm191, %vm196
    %vm200 = vmand %vm192, %vm196
    %v201 = vsel %vm197, 1, 0
    %v202 = vsel %vm198, 1, 0
    %v203 = vsel %vm199, 1, 0
    %v204 = vsel %vm200, 1, 0
    %v205 = vcvt.s32.f32 %v201
    %v206 = vcvt.s32.f32 %v202
    %v207 = vcvt.s32.f32 %v203
    %v208 = vcvt.s32.f32 %v204
    %v209 = vadd.f32 %v183, %v205
    %v210 = vadd.f32 %v184, %v206
    %v211 = vadd.f32 %v185, %v207
    %v212 = vadd.f32 %v186, %v208
    %v213 = vld [vmem:[%s0 + $0x7] sm:$0x1]
    %v214 = vperm.slane %v213, 0
    %vm215 = vcmp.eq.s32.totalorder %v26, %v214
    %vm216 = vcmp.eq.s32.totalorder %v27, %v214
    %vm217 = vcmp.eq.s32.totalorder %v28, %v214
    %vm218 = vcmp.eq.s32.totalorder %v29, %v214
    %vm219 = vcmp.gt.s32.totalorder %v30, 7
    %v220 = vsel %vm219, 1, 0
    %v221 = vperm.slane %v220, 0
    %vm222 = vcmp.eq.s32.totalorder %v221, 1
    %vm223 = vmand %vm215, %vm222
    %vm224 = vmand %vm216, %vm222
    %vm225 = vmand %vm217, %vm222
    %vm226 = vmand %vm218, %vm222
    %v227 = vsel %vm223, 1, 0
    %v228 = vsel %vm224, 1, 0
    %v229 = vsel %vm225, 1, 0
    %v230 = vsel %vm226, 1, 0
    %v231 = vcvt.s32.f32 %v227
    %v232 = vcvt.s32.f32 %v228
    %v233 = vcvt.s32.f32 %v229
    %v234 = vcvt.s32.f32 %v230
    %v235 = vadd.f32 %v209, %v231
    %v236 = vadd.f32 %v210, %v232
    %v237 = vadd.f32 %v211, %v233
    %v238 = vadd.f32 %v212, %v234
    %v239 = vld [vmem:[%s4] sm:$0xf]
    %v240 = vld [vmem:[%s4 + $0x4] sm:$0xf]
    %v241 = vpack.c.bf16 %v236, %v235
    %v242 = vpack.c.bf16 %v238, %v237
    %v245 = vunpack.c.l.b16 %v239
    %v246 = vunpack.c.l.b16 %v240
    %v247 = vpack.c.b16 %v246, %v245
    %vm248 = vcmask 261120
    %v250 = vsel %vm248, %v247, 0
    %252 = vmatpush.bf16.msra.mxu0 0
    %253 = vmatpush.bf16.msra.mxu0 0
    %254 = vmatpush.bf16.msra.mxu0 0
    %255 = vmatpush.bf16.msra.mxu0 0
    %256 = vmatpush.bf16.msra.mxu0 0
    %257 = vmatpush.bf16.msra.mxu0 0
    %258 = vmatpush.bf16.msra.mxu0 %v242
    %259 = vmatpush.bf16.msra.mxu0 %v241
    %260 = vmatmul.bf16.gmra.mxu0 %v250
    %v261 = vpop.f32.mrf.mxu0
    %v262 = vadd.f32 0.0, %v261
    %v263 = vpop.f32.mrf.mxu0
    %v264 = vadd.f32 0.0, %v263
    %265 = vdwg.mxu0
    %v266 = vld [vmem:[%s5] sm:$0xf]
    %v267 = vld [vmem:[%s5 + $0x4] sm:$0xf]
    %v268 = vld [vmem:[%s2] sm:$0xff]
    %v269 = vld [vmem:[%s2 + $0x8] sm:$0xff]
    %v270 = vld [vmem:[%s2 + $0x10] sm:$0xff]
    %v271 = vld [vmem:[%s2 + $0x18] sm:$0xff]
    %v272 = vld [vmem:[%s2 + $0x20] sm:$0xff]
    %v273 = vld [vmem:[%s2 + $0x28] sm:$0xff]
    %v274 = vld [vmem:[%s2 + $0x30] sm:$0xff]
    %v275 = vld [vmem:[%s2 + $0x38] sm:$0xff]
    %v276 = vld [vmem:[%s2 + $0x40] sm:$0xff]
    %v277 = vld [vmem:[%s2 + $0x48] sm:$0xff]
    %v278 = vld [vmem:[%s2 + $0x50] sm:$0xff]
    %v279 = vld [vmem:[%s2 + $0x58] sm:$0xff]
    %v280 = vld [vmem:[%s2 + $0x60] sm:$0xff]
    %v281 = vld [vmem:[%s2 + $0x68] sm:$0xff]
    %v282 = vld [vmem:[%s2 + $0x70] sm:$0xff]
    %v283 = vld [vmem:[%s2 + $0x78] sm:$0xff]
    %v284 = vpack.c.bf16 %v269, %v268
    %v285 = vpack.c.bf16 %v271, %v270
    %v286 = vpack.c.bf16 %v273, %v272
    %v287 = vpack.c.bf16 %v275, %v274
    %v288 = vpack.c.bf16 %v277, %v276
    %v289 = vpack.c.bf16 %v279, %v278
    %v290 = vpack.c.bf16 %v281, %v280
    %v291 = vpack.c.bf16 %v283, %v282
    %v294 = vunpack.c.l.b16 %v266
    %v295 = vunpack.c.l.b16 %v267
    %v296 = vpack.c.b16 %v295, %v294
    %v298 = vsel %vm248, %v296, 0
    %v301 = vsel %vm248, %v284, 0
    %v304 = vsel %vm248, %v285, 0
    %v307 = vsel %vm248, %v286, 0
    %v310 = vsel %vm248, %v287, 0
    %v313 = vsel %vm248, %v288, 0
    %v316 = vsel %vm248, %v289, 0
    %v319 = vsel %vm248, %v290, 0
    %v322 = vsel %vm248, %v291, 0
    %324 = vmatpush.bf16.xpose.msra.mxu0 %v322
    %325 = vmatpush.bf16.xpose.msra.mxu0 %v319
    %326 = vmatpush.bf16.xpose.msra.mxu0 %v316
    %327 = vmatpush.bf16.xpose.msra.mxu0 %v313
    %328 = vmatpush.bf16.xpose.msra.mxu0 %v310
    %329 = vmatpush.bf16.xpose.msra.mxu0 %v307
    %330 = vmatpush.bf16.xpose.msra.mxu0 %v304
    %331 = vmatpush.bf16.xpose.msra.mxu0 %v301
    %332 = vmatmul.bf16.gmra.mxu0 %v298
    %v333 = vpop.f32.mrf.mxu0
    %v334 = vadd.f32 0.0, %v333
    %v335 = vpop.f32.mrf.mxu0
    %v336 = vadd.f32 0.0, %v335
    %337 = vdwg.mxu0
    %v338 = vmin.f32 %v262, 0.0
    %v339 = vmin.f32 %v264, 0.0
    %v340 = vand.u32 2147483647, %v262
    %v341 = vand.u32 2147483647, %v264
    %v342 = vsub.f32 0.0, %v340
    %v343 = vsub.f32 0.0, %v341
    %v344 = vmul.f32 %v342, 1.442695
    %v345 = vpow.pop %v344
    %v346 = vmul.f32 %v343, 1.442695
    %v347 = vpow.pop %v346
    %v348 = vadd.f32 %v345, 1.0
    %v349 = vadd.f32 %v347, 1.0
    %v350 = vlog2.pop %v348
    %v351 = vmul.f32 %v350, 0.6931472
    %v352 = vlog2.pop %v349
    %v353 = vmul.f32 %v352, 0.6931472
    %v354 = vsub.f32 %v338, %v351
    %v355 = vsub.f32 %v339, %v353
    %v356 = vadd.f32 %v354, %v334
    %v357 = vadd.f32 %v355, %v336
    %vm358 = vcmp.lt.s32.totalorder %v26, 16
    %vm359 = vcmp.lt.s32.totalorder %v27, 16
    %v360 = vsel %vm358, 0.0, -1e+30
    %v361 = vsel %vm359, 0.0, -1e+30
    %v362 = vadd.f32 %v356, %v360
    %v363 = vadd.f32 %v357, %v361
    %v364 = vmax.f32 %v362, %v363
    %v365 = vrot.slane %v364, 4
    %v366 = vmax.f32 %v364, %v365
    %v367 = vrot.slane %v366, 2
    %v368 = vmax.f32 %v366, %v367
    %v369 = vrot.slane %v368, 1
    %v370 = vmax.f32 %v368, %v369
    %v371 = vsub.f32 %v362, %v370
    %v372 = vsub.f32 %v363, %v370
    %v373 = vmul.f32 %v371, 1.442695
    %v374 = vpow.pop %v373
    %v375 = vmul.f32 %v372, 1.442695
    %v376 = vpow.pop %v375
    %v377 = vadd.f32 %v374, %v376
    %v378 = vrot.slane %v377, 4
    %v379 = vadd.f32 %v377, %v378
    %v380 = vrot.slane %v379, 2
    %v381 = vadd.f32 %v379, %v380
    %v382 = vrot.slane %v381, 1
    %v383 = vadd.f32 %v381, %v382
    %v384 = vlog2.pop %v383
    %v385 = vmul.f32 %v384, 0.6931472
    %v386 = vadd.f32 %v370, %v385
    %v387 = vld [vmem:[%s3] sm:$0x1]
    %v388 = vperm.slane %v387, 0
    %vm389 = vcmp.eq.s32.totalorder %v26, %v388
    %vm390 = vcmp.eq.s32.totalorder %v27, %v388
    %v391 = vsel %vm389, %v356, 0.0
    %v392 = vsel %vm390, %v357, 0.0
    %v393 = vadd.f32 %v391, %v392
    %v394 = vrot.slane %v393, 4
    %v395 = vadd.f32 %v393, %v394
    %v396 = vrot.slane %v395, 2
    %v397 = vadd.f32 %v395, %v396
    %v398 = vrot.slane %v397, 1
    %v399 = vadd.f32 %v397, %v398
    %v400 = vsub.f32 %v399, %v386
    %401 = vst [vmem:[#allocation2] sm:$0x1] %v400
    // Predicated region
    $region26: #{tpu_custom_call.1} parent=1 // pred_check
      _
    $region27: #{tpu_custom_call.1} parent=1 // pred_check_branch
      %403 = sbr.rel (0) target = $region29
    $region28: #{tpu_custom_call.1} parent=1 // pred_region
      %405 = vsyncadd [#allocation3], 0
      %s407 = sshll.u32 [#allocation2], 4
      %s408 = int_to_ptr.vmem [resolvable:$true] %s407
      %s409 = sshll.u32 %s6, 4
      %s410 = int_to_ptr.hbm [resolvable:$true] %s409
      %412 = dma.vmem_to_hbm [thread:$0]  %s408, 16, %s410, [#allocation3]
    $region29: #{tpu_custom_call.1} parent=1 // pred_fallthru
      _
    // Predicated region
    $region30: #{tpu_custom_call.1} parent=1 // pred_check
      _
    $region31: #{tpu_custom_call.1} parent=1 // pred_check_branch
      %414 = sbr.rel (0) target = $region33
    $region32: #{tpu_custom_call.1} parent=1 // pred_region
      %416 = dma.done [#allocation3], 16
    $region33: #{tpu_custom_call.1} parent=1 // pred_fallthru
      _
    %417 = vsyncpa [#allocation3], 1

</llo_original>
